<compile_context>
chip_gen: v6e
topology: v6e:2x2x1
jax: 0.10.0
libtpu: 0.0.40
codegen_flags: <defaults>
</compile_context>

<pallas_src>
import functools

import jax
import jax.numpy as jnp
from jax.experimental import pallas as pl
from jax.experimental.pallas import tpu as pltpu


_OUT_SUB = 8      # output rows per "core" -> clean (8, 128) output block
_OUT_LANES = 128  # full-lane output block (unmasked store)
_BUF_BUDGET_BYTES = 16 * 1024 * 1024   # 2 mel inputs x 2 pipeline buffers
_VMEM_LIMIT_BYTES = 32 * 1024 * 1024   # above v5e's 16 MiB scoped default, safe on v7x


def _round_down(x, m):
    return (x // m) * m


def _make_kernel(*, cols, tr, fold, s_total, s_per_core, tail_rows, ragged, has_dup,
                 inv_mel_n, inv_dur_n):
    """Builds the kernel with all shape/schedule constants baked in statically."""
    P = tr // fold

    def fold_sum(x):
        # (tr, cols) -> (P, cols): sublane-group fold, pure VALU adds, no cross-lane.
        if fold == 1:
            return x
        return x.reshape(fold, P, cols).sum(axis=0)

    def kernel(mel_t_ref, mel_p_ref, dur_t_ref, dur_p_ref, out_ref, acc_ref):
        c = pl.program_id(0)            # "core" (parallel) axis
        j = pl.program_id(1)            # sequential reduction axis
        blk = c * s_per_core + j        # global row-block index

        # --- init per-core accumulator ---
        @pl.when(j == 0)
        def _():
            acc_ref[...] = jnp.zeros_like(acc_ref)

        # --- per-tile squared error; cast in-kernel (VPU), halves HBM for bf16 ---
        diff = mel_p_ref[...].astype(jnp.float32) - mel_t_ref[...].astype(jnp.float32)
        sq = diff * diff

        if ragged or has_dup:
            # Hot path: full blocks, no mask.
            @pl.when(blk < s_total - 1)
            def _():
                acc_ref[...] += fold_sum(sq)

            # Final valid block: mask the ragged tail (static bound).
            @pl.when(blk == s_total - 1)
            def _():
                if ragged:
                    row = jax.lax.broadcasted_iota(jnp.int32, (tr, cols), 0)
                    acc_ref[...] += fold_sum(jnp.where(row < tail_rows, sq, 0.0))
                else:
                    acc_ref[...] += fold_sum(sq)
            # blk > s_total - 1: duplicated (index-map-clamped) block on an odd
            # core split -> contribute nothing.
        else:
            acc_ref[...] += fold_sum(sq)

        # --- finalize per core: small reduce + tiny duration MSLE + block write ---
        @pl.when(j == s_per_core - 1)
        def _():
            mel_part = jnp.sum(acc_ref[...]) * inv_mel_n
            dur_t = dur_t_ref[...].astype(jnp.float32)
            dur_p = dur_p_ref[...].astype(jnp.float32)
            dd = jnp.log(dur_p + 1.0) - jnp.log(dur_t + 1.0)
            dur_loss = jnp.sum(dd * dd) * inv_dur_n
            val = mel_part + jnp.where(c == 0, dur_loss, 0.0)   # add MSLE once
            out_ref[...] = jnp.broadcast_to(val, (_OUT_SUB, _OUT_LANES))

    return kernel


@functools.partial(jax.jit, static_argnames=("tile_rows",))
def fastspeech_loss(mel_target, duration, pred_mel, pred_duration, tile_rows=None):
    """mel_target, pred_mel: [B, T, n_mels]; duration, pred_duration: [B, T].

    Inputs may be f32 or bf16; the kernel casts to f32 internally.
    `tile_rows` optionally caps the row-tile size (testing / tuning).
    """
    B, T, M = mel_target.shape
    N = B * T * M
    itemsize = jnp.dtype(mel_target.dtype).itemsize

    # ---- lane-dense layout for the mel stream when it divides evenly ----
    rows, cols = B * T, M
    for L in (512, 256, 128):
        if N % L == 0 and (N // L) >= 8:
            rows, cols = N // L, L
            break
    mel_t2 = mel_target.reshape(rows, cols)
    mel_p2 = pred_mel.reshape(rows, cols)
    dur_t2 = duration.reshape(B, T)
    dur_p2 = pred_duration.reshape(B, T)

    # ---- row-tile size from the VMEM buffer budget (dtype / lane-padding aware) ----
    cols_pad = ((cols + 127) // 128) * 128
    tr = _BUF_BUDGET_BYTES // (4 * cols_pad * itemsize)
    tr = max(8, _round_down(tr, 8))
    if tr >= 256:
        tr = _round_down(tr, 256)
    if tile_rows is not None:
        tr = min(tr, max(8, _round_down(int(tile_rows), 8)))
    if rows >= 8:
        tr = max(8, min(tr, _round_down(rows, 8)))   # block start always in-bounds
    else:
        tr = rows                                    # single full-extent block

    # ---- accumulator fold factor (acc shape (P, cols), P | tr, P multiple of 8) ----
    P = tr
    for cand in (256, 128, 64, 32, 16, 8):
        if tr % cand == 0:
            P = cand
            break
    fold = tr // P

    # ---- schedule: split row-blocks across 2 "cores" (v7x), sequential otherwise ----
    s_total = pl.cdiv(rows, tr)
    ncores = 2 if s_total >= 2 else 1
    s_per_core = pl.cdiv(s_total, ncores)
    has_dup = (s_total % ncores) != 0          # odd split -> one clamped/dup step
    ragged = (rows % tr) != 0
    tail_rows = rows - (s_total - 1) * tr

    if has_dup:
        def mel_map(c, j):
            return (jnp.minimum(c * s_per_core + j, s_total - 1), 0)
    else:
        def mel_map(c, j):
            return (c * s_per_core + j, 0)

    kernel = _make_kernel(
        cols=cols, tr=tr, fold=fold, s_total=s_total, s_per_core=s_per_core,
        tail_rows=tail_rows, ragged=ragged, has_dup=has_dup,
        inv_mel_n=1.0 / float(N), inv_dur_n=1.0 / float(B * T))

    cost = pl.CostEstimate(
        flops=3 * N + 8 * B * T,
        transcendentals=2 * B * T,
        bytes_accessed=2 * N * itemsize
        + 2 * B * T * jnp.dtype(duration.dtype).itemsize
        + ncores * _OUT_SUB * _OUT_LANES * 4)

    out = pl.pallas_call(
        kernel,
        out_shape=jax.ShapeDtypeStruct((ncores * _OUT_SUB, _OUT_LANES), jnp.float32),
        grid=(ncores, s_per_core),
        in_specs=[
            pl.BlockSpec((tr, cols), mel_map),            # mel_target tile
            pl.BlockSpec((tr, cols), mel_map),            # pred_mel tile
            pl.BlockSpec((B, T), lambda c, j: (0, 0)),    # duration (resident, tiny)
            pl.BlockSpec((B, T), lambda c, j: (0, 0)),    # pred_duration (resident)
        ],
        out_specs=pl.BlockSpec((_OUT_SUB, _OUT_LANES), lambda c, j: (c, 0)),
        scratch_shapes=[pltpu.VMEM((P, cols), jnp.float32)],
        compiler_params=pltpu.CompilerParams(
            dimension_semantics=("parallel", "arbitrary"),
            vmem_limit_bytes=_VMEM_LIMIT_BYTES,
        ),
        cost_estimate=cost,
    )(mel_t2, mel_p2, dur_t2, dur_p2)

    # One partial per core (broadcast across its (8,128) block); combine here.
    partials = out.reshape(ncores, _OUT_SUB, _OUT_LANES)[:, 0, 0]
    return jnp.sum(partials)


def fastspeech_loss_ref(mel_target, duration, pred_mel, pred_duration):
    mel_target = mel_target.astype(jnp.float32)
    pred_mel = pred_mel.astype(jnp.float32)
    duration = duration.astype(jnp.float32)
    pred_duration = pred_duration.astype(jnp.float32)
    mel_loss = jnp.mean((pred_mel - mel_target) ** 2)
    dur_loss = jnp.mean((jnp.log(pred_duration + 1.0) - jnp.log(duration + 1.0)) ** 2)
    return mel_loss + dur_loss


def _make_inputs(key, B, T, M, dtype=jnp.float32):
    k1, k2, k3, k4 = jax.random.split(key, 4)
    mel_target = jax.random.normal(k1, (B, T, M), dtype=jnp.float32).astype(dtype)
    pred_mel = jax.random.normal(k2, (B, T, M), dtype=jnp.float32).astype(dtype)
    duration = jax.random.uniform(k3, (B, T), dtype=jnp.float32, minval=0.0, maxval=10.0)
    pred_duration = jax.random.uniform(k4, (B, T), dtype=jnp.float32, minval=0.0, maxval=10.0)
    return mel_target, duration, pred_mel, pred_duration


if __name__ == "__main__":
    key = jax.random.PRNGKey(0)
    keys = jax.random.split(key, 5)

    # case 1: tiny shapes -> (B*T, M) fallback layout, single core, single step.
    args1 = _make_inputs(keys[0], 2, 8, 32)
    loss1 = fastspeech_loss(*args1)
    jax.block_until_ready(loss1)
    ref1 = fastspeech_loss_ref(*args1)
    assert jnp.allclose(loss1, ref1, rtol=1e-5, atol=1e-5), (loss1, ref1)

    # case 2: lane-dense (125, 128) view, 2-way core split, ragged final block.
    args2 = _make_inputs(keys[1], 2, 100, 80)
    loss2 = fastspeech_loss(*args2, tile_rows=64)
    jax.block_until_ready(loss2)
    ref2 = fastspeech_loss_ref(*args2)
    assert jnp.allclose(loss2, ref2, rtol=1e-5, atol=1e-5), (loss2, ref2)

    # case 3: same shape, odd block count -> exercises the clamped/duplicate step.
    loss3 = fastspeech_loss(*args2, tile_rows=48)
    jax.block_until_ready(loss3)
    assert jnp.allclose(loss3, ref2, rtol=1e-5, atol=1e-5), (loss3, ref2)

    # case 4: same shape, auto tile size (budget-derived).
    loss4 = fastspeech_loss(*args2)
    jax.block_until_ready(loss4)
    assert jnp.allclose(loss4, ref2, rtol=1e-5, atol=1e-5), (loss4, ref2)

    # case 5: bf16 inputs, lane-dense 512-wide view (in-kernel f32 upcast).
    args5 = _make_inputs(keys[2], 2, 64, 128, dtype=jnp.bfloat16)
    loss5 = fastspeech_loss(*args5)
    jax.block_until_ready(loss5)
    ref5 = fastspeech_loss_ref(*args5)
    assert jnp.allclose(loss5, ref5, rtol=1e-4, atol=1e-4), (loss5, ref5)

    print("KERNEL_OK")
</pallas_src>

<mosaic_0001>
module attributes {stable_mosaic.version = 11 : i64} {
  func.func @kernel(%arg0: i32, %arg1: i32, %arg2: memref<16x32xf32, #tpu.memory_space<vmem>>, %arg3: memref<16x32xf32, #tpu.memory_space<vmem>>, %arg4: memref<2x8xf32, #tpu.memory_space<vmem>>, %arg5: memref<2x8xf32, #tpu.memory_space<vmem>>, %arg6: memref<8x128xf32, #tpu.memory_space<vmem>>, %arg7: memref<16x32xf32, #tpu.memory_space<vmem>>) attributes {dimension_semantics = [#tpu.dimension_semantics<parallel>, #tpu.dimension_semantics<arbitrary>], iteration_bounds = array<i64: 1, 1>, scalar_prefetch = 0 : i64, scratch_operands = 1 : i64, tpu.core_type = #tpu.core_type<tc>, window_params = [{transform_indices = @transform_0, window_bounds = array<i64: 16, 32>}, {transform_indices = @transform_1, window_bounds = array<i64: 16, 32>}, {pipeline_mode = #tpu.pipeline_mode<synchronous>, transform_indices = @transform_2, window_bounds = array<i64: 2, 8>}, {pipeline_mode = #tpu.pipeline_mode<synchronous>, transform_indices = @transform_3, window_bounds = array<i64: 2, 8>}, {transform_indices = @transform_4, window_bounds = array<i64: 8, 128>}]} {
    %c0_i32 = arith.constant 0 : i32
    %0 = arith.cmpi eq, %arg1, %c0_i32 : i32
    %1 = arith.extui %0 : i1 to i32
    %c0_i32_0 = arith.constant 0 : i32
    %2 = arith.cmpi ne, %1, %c0_i32_0 : i32
    scf.if %2 {
      %cst = arith.constant 0.000000e+00 : f32
      %13 = vector.broadcast %cst : f32 to vector<16x32xf32>
      %c0_10 = arith.constant 0 : index
      %c0_11 = arith.constant 0 : index
      %14 = vector.load %arg7[%c0_10, %c0_11] : memref<16x32xf32, #tpu.memory_space<vmem>>, vector<16x32xf32>
      tpu.vector_store %arg7[%c0_10, %c0_11], %13 {strides = array<i32>} : memref<16x32xf32, #tpu.memory_space<vmem>>, vector<16x32xf32>,
    } else {
    }
    %c0 = arith.constant 0 : index
    %c0_1 = arith.constant 0 : index
    %3 = vector.load %arg3[%c0, %c0_1] : memref<16x32xf32, #tpu.memory_space<vmem>>, vector<16x32xf32>
    %c0_2 = arith.constant 0 : index
    %c0_3 = arith.constant 0 : index
    %4 = vector.load %arg2[%c0_2, %c0_3] : memref<16x32xf32, #tpu.memory_space<vmem>>, vector<16x32xf32>
    %5 = arith.subf %3, %4 : vector<16x32xf32>
    %6 = arith.mulf %5, %5 : vector<16x32xf32>
    %c0_4 = arith.constant 0 : index
    %c0_5 = arith.constant 0 : index
    %7 = vector.load %arg7[%c0_4, %c0_5] : memref<16x32xf32, #tpu.memory_space<vmem>>, vector<16x32xf32>
    %8 = arith.addf %7, %6 : vector<16x32xf32>
    %c0_6 = arith.constant 0 : index
    %c0_7 = arith.constant 0 : index
    %9 = vector.load %arg7[%c0_6, %c0_7] : memref<16x32xf32, #tpu.memory_space<vmem>>, vector<16x32xf32>
    tpu.vector_store %arg7[%c0_6, %c0_7], %8 {strides = array<i32>} : memref<16x32xf32, #tpu.memory_space<vmem>>, vector<16x32xf32>,
    %c0_i32_8 = arith.constant 0 : i32
    %10 = arith.cmpi eq, %arg1, %c0_i32_8 : i32
    %11 = arith.extui %10 : i1 to i32
    %c0_i32_9 = arith.constant 0 : i32
    %12 = arith.cmpi ne, %11, %c0_i32_9 : i32
    scf.if %12 {
      %c0_10 = arith.constant 0 : index
      %c0_11 = arith.constant 0 : index
      %13 = vector.load %arg7[%c0_10, %c0_11] : memref<16x32xf32, #tpu.memory_space<vmem>>, vector<16x32xf32>
      %14 = vector.shape_cast %13 : vector<16x32xf32> to vector<1x16x32xf32>
      %cst = arith.constant dense<0.000000e+00> : vector<1xf32>
      %15 = vector.multi_reduction <add>, %14, %cst [1, 2] : vector<1x16x32xf32> to vector<1xf32>
      %16 = vector.shape_cast %15 : vector<1xf32> to vector<1x1x1xf32>
      %17 = vector.extract %16[0, 0, 0] : f32 from vector<1x1x1xf32>
      %cst_12 = arith.constant 0.001953125 : f32
      %18 = arith.mulf %17, %cst_12 : f32
      %c0_13 = arith.constant 0 : index
      %c0_14 = arith.constant 0 : index
      %19 = vector.load %arg4[%c0_13, %c0_14] : memref<2x8xf32, #tpu.memory_space<vmem>>, vector<2x8xf32>
      %c0_15 = arith.constant 0 : index
      %c0_16 = arith.constant 0 : index
      %20 = vector.load %arg5[%c0_15, %c0_16] : memref<2x8xf32, #tpu.memory_space<vmem>>, vector<2x8xf32>
      %cst_17 = arith.constant 1.000000e+00 : f32
      %21 = vector.broadcast %cst_17 : f32 to vector<2x8xf32>
      %22 = arith.addf %20, %21 : vector<2x8xf32>
      %23 = math.log %22 : vector<2x8xf32>
      %cst_18 = arith.constant 1.000000e+00 : f32
      %24 = vector.broadcast %cst_18 : f32 to vector<2x8xf32>
      %25 = arith.addf %19, %24 : vector<2x8xf32>
      %26 = math.log %25 : vector<2x8xf32>
      %27 = arith.subf %23, %26 : vector<2x8xf32>
      %28 = arith.mulf %27, %27 : vector<2x8xf32>
      %29 = vector.shape_cast %28 : vector<2x8xf32> to vector<1x2x8xf32>
      %cst_19 = arith.constant dense<0.000000e+00> : vector<1xf32>
      %30 = vector.multi_reduction <add>, %29, %cst_19 [1, 2] : vector<1x2x8xf32> to vector<1xf32>
      %31 = vector.shape_cast %30 : vector<1xf32> to vector<1x1x1xf32>
      %32 = vector.extract %31[0, 0, 0] : f32 from vector<1x1x1xf32>
      %cst_20 = arith.constant 6.250000e-02 : f32
      %33 = arith.mulf %32, %cst_20 : f32
      %c0_i32_21 = arith.constant 0 : i32
      %34 = arith.cmpi eq, %arg0, %c0_i32_21 : i32
      %cst_22 = arith.constant 0.000000e+00 : f32
      %35 = arith.select %34, %33, %cst_22 : f32
      %36 = arith.addf %18, %35 : f32
      %37 = vector.broadcast %36 : f32 to vector<8x128xf32>
      %c0_23 = arith.constant 0 : index
      %c0_24 = arith.constant 0 : index
      %38 = vector.load %arg6[%c0_23, %c0_24] : memref<8x128xf32, #tpu.memory_space<vmem>>, vector<8x128xf32>
      tpu.vector_store %arg6[%c0_23, %c0_24], %37 {strides = array<i32>} : memref<8x128xf32, #tpu.memory_space<vmem>>, vector<8x128xf32>,
    } else {
    }
    return
  }
  func.func @transform_0(%arg0: i32, %arg1: i32) -> (i32, i32) {
    %c1_i32 = arith.constant 1 : i32
    %0 = arith.muli %arg0, %c1_i32 : i32
    %1 = arith.addi %0, %arg1 : i32
    %c0_i32 = arith.constant 0 : i32
    %c0_i32_0 = arith.constant 0 : i32
    return %1, %c0_i32 : i32, i32
  }
  func.func @transform_1(%arg0: i32, %arg1: i32) -> (i32, i32) {
    %c1_i32 = arith.constant 1 : i32
    %0 = arith.muli %arg0, %c1_i32 : i32
    %1 = arith.addi %0, %arg1 : i32
    %c0_i32 = arith.constant 0 : i32
    %c0_i32_0 = arith.constant 0 : i32
    return %1, %c0_i32 : i32, i32
  }
  func.func @transform_2(%arg0: i32, %arg1: i32) -> (i32, i32) {
    %c0_i32 = arith.constant 0 : i32
    %c0_i32_0 = arith.constant 0 : i32
    %c0_i32_1 = arith.constant 0 : i32
    return %c0_i32, %c0_i32_0 : i32, i32
  }
  func.func @transform_3(%arg0: i32, %arg1: i32) -> (i32, i32) {
    %c0_i32 = arith.constant 0 : i32
    %c0_i32_0 = arith.constant 0 : i32
    %c0_i32_1 = arith.constant 0 : i32
    return %c0_i32, %c0_i32_0 : i32, i32
  }
  func.func @transform_4(%arg0: i32, %arg1: i32) -> (i32, i32) {
    %c0_i32 = arith.constant 0 : i32
    %c0_i32_0 = arith.constant 0 : i32
    return %arg0, %c0_i32 : i32, i32
  }
}

</mosaic_0001>

<llo_original>
// kernel: fastspeech_loss.1
$region0: #{fastspeech_loss.1}
  #allocation0 [shape = 'u32[]', space=smem, size = 0x4, offset = 0x4, fixed_abs, tag = 'smem constant byte address 0x4 - core index']
  #allocation1 [shape = 'u32[144,128]{1,0:T(1,128)}', space=vmem, size = 0x12000, scoped, tag = 'internal scratch']
  #allocation2 [shape = 'f32[16,32]{1,0:T(8,128)}', space=vmem, size = 0x2000, scoped, tag = 'scratch operand']
  %s0 = inlined_call_operand.hbm [shape: f32[16,32], index: 0, kind: input, shape index: {}]
  %s1 = inlined_call_operand.hbm [shape: f32[16,32], index: 1, kind: input, shape index: {}]
  %s2 = inlined_call_operand.vmem [shape: f32[2,8], index: 2, kind: input, shape index: {}]
  %s3 = inlined_call_operand.vmem [shape: f32[2,8], index: 3, kind: input, shape index: {}]
  %s4 = inlined_call_operand.vmem [shape: f32[8,128], index: 4, kind: output, shape index: {}]
  %s5 = sld [smem:[#allocation0]]
  $region42: #{fastspeech_loss.1} parent=0
    _
  %s7 = ssub.s32 1, %s5
  %s8 = scalar_select 0, %s7, %s5
  $region1: #{fastspeech_loss.1} parent=0
    #allocation3 [shape = 'u8[8192]{0}', space=vmem, size = 0x2000, scoped, tag = 'input window, operand 0, single buffered']
    #allocation4 [shape = 's32[1]{0}', space=sflag, size = 0x4, scoped, tag = 'scoped memory for fastspeech_loss.1']
    #allocation5 [shape = 'u8[8192]{0}', space=vmem, size = 0x2000, scoped, tag = 'input window, operand 1, single buffered']
    #allocation6 [shape = 's32[1]{0}', space=sflag, size = 0x4, scoped, tag = 'scoped memory for fastspeech_loss.1']
    %9 = vsyncpa [#allocation4], 0
    %10 = vsyncpa [#allocation6], 0
    // Predicated region
    $region2: #{fastspeech_loss.1} parent=1 // pred_check
      _
    $region3: #{fastspeech_loss.1} parent=1 // pred_check_branch
      %12 = sbr.rel (0) target = $region5
    $region4: #{fastspeech_loss.1} parent=1 // pred_region
      %s13 = sadd.s32 0, 0
      %s14 = smul.u32 2, %s13
      %s16 = ssub.s32 256, 256
      %17 = vsyncadd [#allocation4], %s16
      %s18 = smul.addr %s14, 128
      %s19 = scalar_lea.hbm %s0, %s18
      %s20 = sshll.u32 [#allocation3], 4
      %s21 = int_to_ptr.vmem [resolvable:$true] %s20
      %26 = dma.hbm_to_vmem [thread:$0]  %s19, 256, %s21, [#allocation4], 128, 128, 8
    $region5: #{fastspeech_loss.1} parent=1 // pred_fallthru
      _
    // Predicated region
    $region6: #{fastspeech_loss.1} parent=1 // pred_check
      _
    $region7: #{fastspeech_loss.1} parent=1 // pred_check_branch
      %28 = sbr.rel (0) target = $region9
    $region8: #{fastspeech_loss.1} parent=1 // pred_region
      %s29 = sadd.s32 0, 0
      %s30 = smul.u32 2, %s29
      %s32 = ssub.s32 256, 256
      %33 = vsyncadd [#allocation6], %s32
      %s34 = smul.addr %s30, 128
      %s35 = scalar_lea.hbm %s1, %s34
      %s36 = sshll.u32 [#allocation5], 4
      %s37 = int_to_ptr.vmem [resolvable:$true] %s36
      %42 = dma.hbm_to_vmem [thread:$0]  %s35, 256, %s37, [#allocation6], 128, 128, 8
    $region9: #{fastspeech_loss.1} parent=1 // pred_fallthru
      _
    // Predicated region
    $region10: #{fastspeech_loss.1} parent=1 // pred_check
      _
    $region11: #{fastspeech_loss.1} parent=1 // pred_check_branch
      %44 = sbr.rel (0) target = $region13
    $region12: #{fastspeech_loss.1} parent=1 // pred_region
      _
    $region13: #{fastspeech_loss.1} parent=1 // pred_fallthru
      _
    // Predicated region
    $region14: #{fastspeech_loss.1} parent=1 // pred_check
      _
    $region15: #{fastspeech_loss.1} parent=1 // pred_check_branch
      %46 = sbr.rel (0) target = $region17
    $region16: #{fastspeech_loss.1} parent=1 // pred_region
      _
    $region17: #{fastspeech_loss.1} parent=1 // pred_fallthru
      _
    // Predicated region
    $region18: #{fastspeech_loss.1} parent=1 // pred_check
      _
    $region19: #{fastspeech_loss.1} parent=1 // pred_check_branch
      %48 = sbr.rel (0) target = $region21
    $region20: #{fastspeech_loss.1} parent=1 // pred_region
      %49 = dma.done [#allocation4], 256
    $region21: #{fastspeech_loss.1} parent=1 // pred_fallthru
      _
    // Predicated region
    $region22: #{fastspeech_loss.1} parent=1 // pred_check
      _
    $region23: #{fastspeech_loss.1} parent=1 // pred_check_branch
      %51 = sbr.rel (0) target = $region25
    $region24: #{fastspeech_loss.1} parent=1 // pred_region
      %52 = dma.done [#allocation6], 256
    $region25: #{fastspeech_loss.1} parent=1 // pred_fallthru
      _
    %s53 = sadd.s32 0, 0
    %s54 = smul.u32 2, %s53
    %s55 = sadd.s32 0, 0
    %s56 = smul.u32 2, %s55
    %p57 = scmp.eq.s32.totalorder 0, 0
    // Predicated region
    $region26: #{fastspeech_loss.1} parent=1 // pred_check
      %p58 = pneg %p57
    $region27: #{fastspeech_loss.1} parent=1 // pred_check_branch
      %60 = sbr.rel (%p58) target = $region29
    $region28: #{fastspeech_loss.1} parent=1 // pred_region
      %vm61 = vcmask 261120
      %62 = vst.msk [vmem:[#allocation2] sm:$0xff] %vm61, 0.0
      %63 = vst.msk [vmem:[#allocation2 + $0x8] sm:$0xff] %vm61, 0.0
    $region29: #{fastspeech_loss.1} parent=1 // pred_fallthru
      _
    %v64 = vld [vmem:[#allocation5] sm:$0xff]
    %v65 = vld [vmem:[#allocation5 + $0x8] sm:$0xff]
    %v66 = vld [vmem:[#allocation3] sm:$0xff]
    %v67 = vld [vmem:[#allocation3 + $0x8] sm:$0xff]
    %v68 = vsub.f32 %v64, %v66
    %v69 = vsub.f32 %v65, %v67
    %v70 = vmul.f32 %v68, %v68
    %v71 = vmul.f32 %v69, %v69
    %v72 = vld [vmem:[#allocation2] sm:$0xff]
    %v73 = vld [vmem:[#allocation2 + $0x8] sm:$0xff]
    %v74 = vadd.f32 %v72, %v70
    %v75 = vadd.f32 %v73, %v71
    %vm76 = vcmask 261120
    %77 = vst.msk [vmem:[#allocation2] sm:$0xff] %vm76, %v74
    %78 = vst.msk [vmem:[#allocation2 + $0x8] sm:$0xff] %vm76, %v75
    // Predicated region
    $region30: #{fastspeech_loss.1} parent=1 // pred_check
      %p79 = pneg %p57
    $region31: #{fastspeech_loss.1} parent=1 // pred_check_branch
      %81 = sbr.rel (%p79) target = $region33
    $region32: #{fastspeech_loss.1} parent=1 // pred_region
      %v82 = vld [vmem:[#allocation2] sm:$0xff]
      %v83 = vld [vmem:[#allocation2 + $0x8] sm:$0xff]
      %v84 = vsel %vm76, %v82, 0.0
      %v85 = vsel %vm76, %v83, 0.0
      %v86 = vadd.f32 %v84, %v85
      %87 = vadd.xlane.f32.xlu0 %v86
      %v88 = vpop.xlane.xlu0 %87
      %v89 = vrot.slane %v88, 4
      %v90 = vadd.f32 %v88, %v89
      %v91 = vrot.slane %v90, 2
      %v92 = vadd.f32 %v90, %v91
      %v93 = vrot.slane %v92, 1
      %v94 = vadd.f32 %v92, %v93
      %s95 = vtos %v94
      %s96 = smul.f32 %s95, 0.001953125
      %v97 = vld [vmem:[%s2] sm:$0x3]
      %v98 = vld [vmem:[%s3] sm:$0x3]
      %v99 = vadd.f32 %v98, 1.0
      %v100 = vlog2.pop %v99
      %v101 = vmul.f32 %v100, 0.6931472
      %v102 = vadd.f32 %v97, 1.0
      %v103 = vlog2.pop %v102
      %v104 = vmul.f32 %v103, 0.6931472
      %v105 = vsub.f32 %v101, %v104
      %v106 = vmul.f32 %v105, %v105
      %vm107 = vcmask 58368
      %v108 = vsel %vm107, %v106, 0.0
      %109 = vadd.xlane.f32.xlu0 %v108
      %v110 = vpop.xlane.xlu0 %109
      %v111 = vrot.slane %v110, 4
      %v112 = vadd.f32 %v110, %v111
      %v113 = vrot.slane %v112, 2
      %v114 = vadd.f32 %v112, %v113
      %v115 = vrot.slane %v114, 1
      %v116 = vadd.f32 %v114, %v115
      %s117 = vtos %v116
      %s118 = smul.f32 %s117, 0.0625
      %p119 = scmp.eq.s32.totalorder 0, 0
      %s120 = scalar_select %p119, %s118, 0.0
      %s121 = sadd.f32 %s96, %s120
      %v122 = vstv %s121
      %123 = vst [vmem:[%s4] sm:$0xff] %v122
    $region33: #{fastspeech_loss.1} parent=1 // pred_fallthru
      _
    // Predicated region
    $region34: #{fastspeech_loss.1} parent=1 // pred_check
      _
    $region35: #{fastspeech_loss.1} parent=1 // pred_check_branch
      %125 = sbr.rel (0) target = $region37
    $region36: #{fastspeech_loss.1} parent=1 // pred_region
      _
    $region37: #{fastspeech_loss.1} parent=1 // pred_fallthru
      _
    // Predicated region
    $region38: #{fastspeech_loss.1} parent=1 // pred_check
      _
    $region39: #{fastspeech_loss.1} parent=1 // pred_check_branch
      %127 = sbr.rel (0) target = $region41
    $region40: #{fastspeech_loss.1} parent=1 // pred_region
      _
    $region41: #{fastspeech_loss.1} parent=1 // pred_fallthru
      _
    %128 = vsyncpa [#allocation4], 1
    %129 = vsyncpa [#allocation6], 1

</llo_original>
